<compile_context>
chip_gen: v7x
topology: tpu7x:2x2x1
jax: 0.10.0
libtpu: 0.0.40
codegen_flags: <defaults>
</compile_context>

<pallas_src>
import math
from functools import partial

import jax
import jax.numpy as jnp
from jax import lax
from jax.experimental import pallas as pl
from jax.experimental.pallas import tpu as pltpu


def _round_up(a, b):
    return (a + b - 1) // b * b


def _patch_embed_kernel(p_ref, w_ref, prm_ref, o_ref, *, n_real, eps):
    """One M-tile: (TM, K) @ (K, N_pad) on the MXU, then f32 LayerNorm.

    prm_ref packs [conv bias; ln gamma; ln beta; valid-lane mask] as four
    (N_pad,) f32 rows."""
    # Conv-as-matmul, f32 accumulation.
    x = jnp.dot(p_ref[...], w_ref[...], preferred_element_type=jnp.float32)
    prm = prm_ref[...]                       # (4, N_pad) f32
    x = x + prm[0:1, :]                      # conv bias; padded lanes stay 0

    # LayerNorm over the true embed_dim, all f32.  Padded weight columns AND
    # padded conv bias are exactly zero by construction in the wrapper, so the
    # padded lanes of x are exactly zero and sum/n_real is the true mean.
    inv_n = jnp.float32(1.0 / n_real)
    mean = jnp.sum(x, axis=-1, keepdims=True) * inv_n
    centered = x - mean
    if n_real != x.shape[-1]:
        # Zero padded lanes before the variance via a broadcast (1, N_pad)
        # mask row (no (TM, N_pad) iota / compare / select temporaries).
        centered = centered * prm[3:4, :]
    var = jnp.sum(centered * centered, axis=-1, keepdims=True) * inv_n
    y = centered * lax.rsqrt(var + eps) * prm[1:2, :] + prm[2:3, :]
    o_ref[...] = y.astype(o_ref.dtype)


def _im2col_nchw(x, k, stride, pad, dtype):
    """Plain-JAX glue: NCHW -> (B*H_out*W_out, C*k*k), feature order (c,kh,kw).

    Uses k*k strided slices (pure strided copies, no gather HLO) and casts to
    the compute dtype up front so the patch matrix is materialized once, in
    its final dtype, with the true (unpadded) K."""
    B, C, H, W = x.shape
    xp = jnp.pad(x.astype(dtype), ((0, 0), (0, 0), (pad, pad), (pad, pad)))
    H_out = (H + 2 * pad - k) // stride + 1
    W_out = (W + 2 * pad - k) // stride + 1
    slices = []
    for kh in range(k):
        for kw in range(k):
            s = xp[:, :,
                   kh: kh + stride * (H_out - 1) + 1: stride,
                   kw: kw + stride * (W_out - 1) + 1: stride]  # (B,C,H_out,W_out)
            slices.append(s)
    pat = jnp.stack(slices, axis=2)                 # (B, C, k*k, H_out, W_out)
    pat = jnp.transpose(pat, (0, 3, 4, 1, 2))       # (B, H_out, W_out, C, k*k)
    return pat.reshape(B * H_out * W_out, C * k * k), H_out, W_out


def _choose_tm(m_pad8, max_rows, min_tiles=4):
    """Pick the M-tile: a multiple of 8 that divides the 8-rounded row count,
    as large as possible while still giving >= min_tiles grid steps (>= 2
    pipelined tiles per TensorCore on v7x).  Small problems fall back to
    fewer, bigger tiles; awkward row counts fall back to round-up padding."""
    max_rows = max(8, min(max_rows, m_pad8))
    max_rows -= max_rows % 8
    # Pass 1: largest divisor giving >= min_tiles tiles, but keep tiles
    # >= 256 rows so the ~0.35us per-step overhead stays amortized.
    cap = min(max_rows, m_pad8 // min_tiles)
    cap -= cap % 8
    for tm in range(cap, 255, -8):
        if m_pad8 % tm == 0:
            return tm
    # Pass 2: small M -- largest divisor <= max_rows (fewer, larger tiles).
    for tm in range(max_rows, 7, -8):
        if m_pad8 % tm == 0:
            return tm
    # Pass 3: no usable divisor -- pad rows up to a multiple of max_rows.
    return max(8, max_rows)


def _vmem_bytes(tm, k, n_pad, in_bytes, out_bytes):
    return (2 * tm * k * in_bytes            # patch tile, double-buffered
            + 2 * k * n_pad * in_bytes       # weight (constant, 2 buffers)
            + 2 * 4 * n_pad * 4              # packed params
            + 2 * tm * n_pad * out_bytes     # output tile, double-buffered
            + 4 * tm * n_pad * 4)            # f32 LN temporaries in the body


def overlap_patch_embed(x, conv_w, conv_b, ln_w, ln_b, *, stride,
                        max_block_rows=2048, compute_dtype=jnp.bfloat16,
                        out_dtype=None):
    """x: (B, C_in, H, W) NCHW.  Returns (y, H_out, W_out) with
    y: (B, H_out*W_out, embed_dim) — matching the PyTorch forward."""
    embed_dim, in_chans, k, _ = conv_w.shape
    pad = k // 2
    B = x.shape[0]
    if out_dtype is None:
        out_dtype = compute_dtype

    patches, H_out, W_out = _im2col_nchw(x, k, stride, pad, compute_dtype)
    M, K = patches.shape                     # K = C_in*k*k, intentionally unpadded
    N = embed_dim
    N_pad = _round_up(N, 128)                # lane-dense output -> unmasked vst

    m_pad8 = _round_up(M, 8)
    TM = _choose_tm(m_pad8, max_block_rows)

    in_bytes = jnp.dtype(compute_dtype).itemsize
    out_bytes = jnp.dtype(out_dtype).itemsize
    # v7x has only 64 MiB VMEM (32 MiB default scoped); keep the footprint well
    # under that, shrinking TM in the (rare) oversized case.
    budget = 32 * 2**20
    while _vmem_bytes(TM, K, N_pad, in_bytes, out_bytes) > budget and TM > 512:
        TM = max(512, (TM // 2) - ((TM // 2) % 8))
    M_pad = _round_up(m_pad8, TM)            # == M when TM | M and M % 8 == 0

    if M_pad != M:
        patches = jnp.pad(patches, ((0, M_pad - M), (0, 0)))

    # Conv weight (out, in, kh, kw) -> (in*kh*kw, out); pad only the lane dim.
    w_mat = jnp.transpose(conv_w.reshape(embed_dim, K))
    w_mat = jnp.pad(w_mat, ((0, 0), (0, N_pad - N))).astype(compute_dtype)

    # Packed per-lane params: [conv bias; ln gamma; ln beta; valid-lane mask].
    # Padded bias lanes MUST stay zero — the LayerNorm mean trick relies on it.
    pad_n = (0, N_pad - N)
    prm = jnp.stack([
        jnp.pad(conv_b.astype(jnp.float32), pad_n),
        jnp.pad(ln_w.astype(jnp.float32), pad_n),
        jnp.pad(ln_b.astype(jnp.float32), pad_n),
        jnp.pad(jnp.ones((N,), jnp.float32), pad_n),
    ])

    est = _vmem_bytes(TM, K, N_pad, in_bytes, out_bytes)
    vmem_limit = int(min(48 * 2**20, max(32 * 2**20, 3 * est // 2)))

    kernel = partial(_patch_embed_kernel, n_real=N, eps=1e-5)
    out = pl.pallas_call(
        kernel,
        out_shape=jax.ShapeDtypeStruct((M_pad, N_pad), out_dtype),
        grid_spec=pl.GridSpec(
            grid=(M_pad // TM,),
            in_specs=[
                pl.BlockSpec((TM, K), lambda i: (i, 0)),
                pl.BlockSpec((K, N_pad), lambda i: (0, 0)),
                pl.BlockSpec((4, N_pad), lambda i: (0, 0)),
            ],
            out_specs=pl.BlockSpec((TM, N_pad), lambda i: (i, 0)),
        ),
        compiler_params=pltpu.CompilerParams(
            dimension_semantics=("parallel",),
            vmem_limit_bytes=vmem_limit),
    )(patches, w_mat, prm)

    # M_pad == M by construction for typical shapes; the :N slice only copies
    # when embed_dim % 128 != 0 (the lane-dense 128-wide store is kept — it is
    # the bigger lever than avoiding this epilogue slice).
    out = out[:M, :N].reshape(B, H_out * W_out, N)
    return out, H_out, W_out


def _reference(x, conv_w, conv_b, ln_w, ln_b, *, stride):
    """Pure-JAX reference mirroring the PyTorch forward, for a sanity check."""
    k = conv_w.shape[-1]
    pad = k // 2
    y = lax.conv_general_dilated(
        x, conv_w, window_strides=(stride, stride),
        padding=((pad, pad), (pad, pad)),
        dimension_numbers=("NCHW", "OIHW", "NCHW"))
    y = y + conv_b[None, :, None, None]
    B, C, H, W = y.shape
    y = y.reshape(B, C, H * W).transpose(0, 2, 1)           # (B, HW, C)
    mean = jnp.mean(y, axis=-1, keepdims=True)
    var = jnp.mean((y - mean) ** 2, axis=-1, keepdims=True)
    y = (y - mean) * lax.rsqrt(var + 1e-5) * ln_w + ln_b
    return y, H, W


if __name__ == "__main__":
    # Small-shape instantiation consistent with OverlapPatchEmbed:
    #   img_size=16, patch_size=7, stride=4, in_chans=4, embed_dim=32, batch=2
    B, C_in, H_in, W_in = 2, 4, 16, 16
    patch, stride, embed_dim = 7, 4, 32

    key = jax.random.PRNGKey(0)
    kx, kw = jax.random.split(key, 2)
    x = jax.random.normal(kx, (B, C_in, H_in, W_in), dtype=jnp.float32)

    # Deterministic parameter init matching _init_weights:
    #   conv weight ~ N(0, sqrt(2/fan_out)), fan_out = k*k*embed_dim; bias = 0
    #   LayerNorm weight = 1, bias = 0
    fan_out = patch * patch * embed_dim
    conv_w = jax.random.normal(kw, (embed_dim, C_in, patch, patch),
                               dtype=jnp.float32) * math.sqrt(2.0 / fan_out)
    conv_b = jnp.zeros((embed_dim,), dtype=jnp.float32)
    ln_w = jnp.ones((embed_dim,), dtype=jnp.float32)
    ln_b = jnp.zeros((embed_dim,), dtype=jnp.float32)

    y_ref, H_ref, W_ref = _reference(x, conv_w, conv_b, ln_w, ln_b,
                                     stride=stride)

    # f32 path: tight numerical check of the kernel math.
    fwd_f32 = jax.jit(partial(overlap_patch_embed, stride=stride,
                              compute_dtype=jnp.float32, out_dtype=jnp.float32))
    y32, H_out, W_out = fwd_f32(x, conv_w, conv_b, ln_w, ln_b)
    y32 = jax.block_until_ready(y32)
    H_out, W_out = int(H_out), int(W_out)
    assert (H_out, W_out) == (H_ref, W_ref)
    assert y32.shape == (B, H_out * W_out, embed_dim)
    assert jnp.allclose(y32, y_ref, atol=1e-4, rtol=1e-4)

    # bf16 MXU path (performance default): bf16 patches/weights/output,
    # f32 accumulation and f32 LayerNorm -> bf16-appropriate tolerance.
    fwd_bf16 = jax.jit(partial(overlap_patch_embed, stride=stride))
    ybf, _, _ = fwd_bf16(x, conv_w, conv_b, ln_w, ln_b)
    ybf = jax.block_until_ready(ybf)
    assert ybf.dtype == jnp.bfloat16
    assert ybf.shape == (B, H_out * W_out, embed_dim)
    assert jnp.allclose(ybf.astype(jnp.float32), y_ref, atol=4e-2, rtol=4e-2)

    print("KERNEL_OK")
</pallas_src>

<mosaic_0001>
module attributes {stable_mosaic.version = 11 : i64} {
  func.func @_patch_embed_kernel(%arg0: i32, %arg1: memref<32x196xf32, #tpu.memory_space<vmem>>, %arg2: memref<196x128xf32, #tpu.memory_space<vmem>>, %arg3: memref<4x128xf32, #tpu.memory_space<vmem>>, %arg4: memref<32x128xf32, #tpu.memory_space<vmem>>) attributes {dimension_semantics = [#tpu.dimension_semantics<parallel>], iteration_bounds = array<i64: 1>, scalar_prefetch = 0 : i64, scratch_operands = 0 : i64, tpu.core_type = #tpu.core_type<tc>, window_params = [{transform_indices = @transform_0, window_bounds = array<i64: 32, 196>}, {pipeline_mode = #tpu.pipeline_mode<synchronous>, transform_indices = @transform_1, window_bounds = array<i64: 196, 128>}, {pipeline_mode = #tpu.pipeline_mode<synchronous>, transform_indices = @transform_2, window_bounds = array<i64: 4, 128>}, {transform_indices = @transform_3, window_bounds = array<i64: 32, 128>}]} {
    %c0 = arith.constant 0 : index
    %c0_0 = arith.constant 0 : index
    %0 = vector.load %arg1[%c0, %c0_0] : memref<32x196xf32, #tpu.memory_space<vmem>>, vector<32x196xf32>
    %c0_1 = arith.constant 0 : index
    %c0_2 = arith.constant 0 : index
    %1 = vector.load %arg2[%c0_1, %c0_2] : memref<196x128xf32, #tpu.memory_space<vmem>>, vector<196x128xf32>
    %cst = arith.constant dense<0.000000e+00> : vector<32x128xf32>
    %2 = tpu.matmul %0, %1, %cst {dimension_numbers = #tpu.dot_dimension_numbers<[1], [0], [0], [1], [0, 0, 1, 1], [], []>} : vector<32x196xf32>, vector<196x128xf32>, vector<32x128xf32> -> vector<32x128xf32>
    %c0_3 = arith.constant 0 : index
    %c0_4 = arith.constant 0 : index
    %3 = vector.load %arg3[%c0_3, %c0_4] : memref<4x128xf32, #tpu.memory_space<vmem>>, vector<4x128xf32>
    %4 = vector.extract_strided_slice %3 {offsets = [0, 0], sizes = [1, 128], strides = [1, 1]} : vector<4x128xf32> to vector<1x128xf32>
    %5 = vector.broadcast %4 : vector<1x128xf32> to vector<32x128xf32>
    %6 = arith.addf %2, %5 : vector<32x128xf32>
    %cst_5 = arith.constant dense<0.000000e+00> : vector<32xf32>
    %7 = vector.multi_reduction <add>, %6, %cst_5 [1] : vector<32x128xf32> to vector<32xf32>
    %8 = vector.shape_cast %7 : vector<32xf32> to vector<32x1xf32>
    %cst_6 = arith.constant 3.125000e-02 : f32
    %9 = vector.broadcast %cst_6 : f32 to vector<32x1xf32>
    %10 = arith.mulf %8, %9 : vector<32x1xf32>
    %11 = vector.broadcast %10 : vector<32x1xf32> to vector<32x128xf32>
    %12 = arith.subf %6, %11 : vector<32x128xf32>
    %13 = vector.extract_strided_slice %3 {offsets = [3, 0], sizes = [1, 128], strides = [1, 1]} : vector<4x128xf32> to vector<1x128xf32>
    %14 = vector.broadcast %13 : vector<1x128xf32> to vector<32x128xf32>
    %15 = arith.mulf %12, %14 : vector<32x128xf32>
    %16 = arith.mulf %15, %15 : vector<32x128xf32>
    %cst_7 = arith.constant dense<0.000000e+00> : vector<32xf32>
    %17 = vector.multi_reduction <add>, %16, %cst_7 [1] : vector<32x128xf32> to vector<32xf32>
    %18 = vector.shape_cast %17 : vector<32xf32> to vector<32x1xf32>
    %cst_8 = arith.constant 3.125000e-02 : f32
    %19 = vector.broadcast %cst_8 : f32 to vector<32x1xf32>
    %20 = arith.mulf %18, %19 : vector<32x1xf32>
    %cst_9 = arith.constant 9.99999974E-6 : f32
    %21 = vector.broadcast %cst_9 : f32 to vector<32x1xf32>
    %22 = arith.addf %20, %21 : vector<32x1xf32>
    %23 = math.rsqrt %22 : vector<32x1xf32>
    %24 = vector.broadcast %23 : vector<32x1xf32> to vector<32x128xf32>
    %25 = arith.mulf %15, %24 : vector<32x128xf32>
    %26 = vector.extract_strided_slice %3 {offsets = [1, 0], sizes = [1, 128], strides = [1, 1]} : vector<4x128xf32> to vector<1x128xf32>
    %27 = vector.broadcast %26 : vector<1x128xf32> to vector<32x128xf32>
    %28 = arith.mulf %25, %27 : vector<32x128xf32>
    %29 = vector.extract_strided_slice %3 {offsets = [2, 0], sizes = [1, 128], strides = [1, 1]} : vector<4x128xf32> to vector<1x128xf32>
    %30 = vector.broadcast %29 : vector<1x128xf32> to vector<32x128xf32>
    %31 = arith.addf %28, %30 : vector<32x128xf32>
    %c0_10 = arith.constant 0 : index
    %c0_11 = arith.constant 0 : index
    %32 = vector.load %arg4[%c0_10, %c0_11] : memref<32x128xf32, #tpu.memory_space<vmem>>, vector<32x128xf32>
    tpu.vector_store %arg4[%c0_10, %c0_11], %31 {strides = array<i32>} : memref<32x128xf32, #tpu.memory_space<vmem>>, vector<32x128xf32>,
    return
  }
  func.func @transform_0(%arg0: i32) -> (i32, i32) {
    %c0_i32 = arith.constant 0 : i32
    %c0_i32_0 = arith.constant 0 : i32
    return %arg0, %c0_i32 : i32, i32
  }
  func.func @transform_1(%arg0: i32) -> (i32, i32) {
    %c0_i32 = arith.constant 0 : i32
    %c0_i32_0 = arith.constant 0 : i32
    %c0_i32_1 = arith.constant 0 : i32
    return %c0_i32, %c0_i32_0 : i32, i32
  }
  func.func @transform_2(%arg0: i32) -> (i32, i32) {
    %c0_i32 = arith.constant 0 : i32
    %c0_i32_0 = arith.constant 0 : i32
    %c0_i32_1 = arith.constant 0 : i32
    return %c0_i32, %c0_i32_0 : i32, i32
  }
  func.func @transform_3(%arg0: i32) -> (i32, i32) {
    %c0_i32 = arith.constant 0 : i32
    %c0_i32_0 = arith.constant 0 : i32
    return %arg0, %c0_i32 : i32, i32
  }
}

</mosaic_0001>

<llo_original>
// kernel: overlap_patch_embed.1
$region0: #{overlap_patch_embed.1}
  #allocation0 [shape = 'u32[]', space=smem, size = 0x4, offset = 0x4, fixed_abs, tag = 'smem constant byte address 0x4 - core index']
  #allocation1 [shape = 'u32[144,128]{1,0:T(1,128)}', space=vmem, size = 0x12000, scoped, tag = 'internal scratch']
  %s0 = inlined_call_operand.vmem [shape: f32[32,196], index: 0, kind: input, shape index: {}]
  %s1 = inlined_call_operand.vmem [shape: f32[196,128], index: 1, kind: input, shape index: {}]
  %s2 = inlined_call_operand.vmem [shape: f32[4,128], index: 2, kind: input, shape index: {}]
  %s3 = inlined_call_operand.hbm [shape: f32[32,128], index: 3, kind: output, shape index: {}]
  %s4 = sld [smem:[#allocation0]]
  $region22: #{overlap_patch_embed.1} parent=0
    _
  %s6 = ssub.s32 1, %s4
  %s7 = scalar_select 0, %s6, %s4
  $region1: #{overlap_patch_embed.1} parent=0
    #allocation2 [shape = 'u8[16384]{0}', space=vmem, size = 0x4000, scoped, tag = 'output window, operand 0, single buffered']
    #allocation3 [shape = 's32[1]{0}', space=sflag, size = 0x4, scoped, tag = 'scoped memory for overlap_patch_embed.1']
    %8 = vsyncpa [#allocation3], 0
    // Predicated region
    $region2: #{overlap_patch_embed.1} parent=1 // pred_check
      _
    $region3: #{overlap_patch_embed.1} parent=1 // pred_check_branch
      %10 = sbr.rel (0) target = $region5
    $region4: #{overlap_patch_embed.1} parent=1 // pred_region
      _
    $region5: #{overlap_patch_embed.1} parent=1 // pred_fallthru
      _
    // Predicated region
    $region6: #{overlap_patch_embed.1} parent=1 // pred_check
      _
    $region7: #{overlap_patch_embed.1} parent=1 // pred_check_branch
      %12 = sbr.rel (0) target = $region9
    $region8: #{overlap_patch_embed.1} parent=1 // pred_region
      _
    $region9: #{overlap_patch_embed.1} parent=1 // pred_fallthru
      _
    // Predicated region
    $region10: #{overlap_patch_embed.1} parent=1 // pred_check
      _
    $region11: #{overlap_patch_embed.1} parent=1 // pred_check_branch
      %14 = sbr.rel (0) target = $region13
    $region12: #{overlap_patch_embed.1} parent=1 // pred_region
      _
    $region13: #{overlap_patch_embed.1} parent=1 // pred_fallthru
      _
    %v15 = vld [vmem:[%s0] sm:$0xff]
    %v16 = vld [vmem:[%s0 + $0x8] sm:$0xff]
    %v17 = vld [vmem:[%s0 + $0x10] sm:$0xff]
    %v18 = vld [vmem:[%s0 + $0x18] sm:$0xff]
    %v19 = vld [vmem:[%s0 + $0x20] sm:$0xff]
    %v20 = vld [vmem:[%s0 + $0x28] sm:$0xff]
    %v21 = vld [vmem:[%s0 + $0x30] sm:$0xff]
    %v22 = vld [vmem:[%s0 + $0x38] sm:$0xff]
    %v23 = vld [vmem:[%s1] sm:$0xff]
    %v24 = vld [vmem:[%s1 + $0x8] sm:$0xff]
    %v25 = vld [vmem:[%s1 + $0x10] sm:$0xff]
    %v26 = vld [vmem:[%s1 + $0x18] sm:$0xff]
    %v27 = vld [vmem:[%s1 + $0x20] sm:$0xff]
    %v28 = vld [vmem:[%s1 + $0x28] sm:$0xff]
    %v29 = vld [vmem:[%s1 + $0x30] sm:$0xff]
    %v30 = vld [vmem:[%s1 + $0x38] sm:$0xff]
    %v31 = vld [vmem:[%s1 + $0x40] sm:$0xff]
    %v32 = vld [vmem:[%s1 + $0x48] sm:$0xff]
    %v33 = vld [vmem:[%s1 + $0x50] sm:$0xff]
    %v34 = vld [vmem:[%s1 + $0x58] sm:$0xff]
    %v35 = vld [vmem:[%s1 + $0x60] sm:$0xff]
    %v36 = vld [vmem:[%s1 + $0x68] sm:$0xff]
    %v37 = vld [vmem:[%s1 + $0x70] sm:$0xff]
    %v38 = vld [vmem:[%s1 + $0x78] sm:$0xff]
    %v39 = vld [vmem:[%s1 + $0x80] sm:$0xff]
    %v40 = vld [vmem:[%s1 + $0x88] sm:$0xff]
    %v41 = vld [vmem:[%s1 + $0x90] sm:$0xff]
    %v42 = vld [vmem:[%s1 + $0x98] sm:$0xff]
    %v43 = vld [vmem:[%s1 + $0xa0] sm:$0xff]
    %v44 = vld [vmem:[%s1 + $0xa8] sm:$0xff]
    %v45 = vld [vmem:[%s1 + $0xb0] sm:$0xff]
    %v46 = vld [vmem:[%s1 + $0xb8] sm:$0xff]
    %v47 = vld [vmem:[%s1 + $0xc0] sm:$0xf]
    %v48 = vld [vmem:[%s2] sm:$0xf]
    %v49 = vlaneseq
    %v50 = vshrl.u32 %v49, 7
    %v51 = vsub.s32 0, %v50
    %v52 = vrot.slane %v48, %v51
    %vm53 = vcmask 556032
    %v55 = vsel %vm53, %v16, 0
    %v58 = vsel %vm53, %v18, 0
    %v61 = vsel %vm53, %v20, 0
    %v64 = vsel %vm53, %v22, 0
    %vm66 = vcmask 1043456
    %v68 = vsel %vm66, %v47, 0
    %70 = vmatprep.subr.mxu0 0.0
    %71 = vmatpush1.msra.mxu0 %v23
    %72 = vmatprep.subr.mxu0 0.0
    %73 = vmatpush1.msra.mxu0 %v24
    %74 = vmatprep.subr.mxu0 0.0
    %75 = vmatpush1.msra.mxu0 %v25
    %76 = vmatprep.subr.mxu0 0.0
    %77 = vmatpush1.msra.mxu0 %v26
    %78 = vmatprep.subr.mxu0 0.0
    %79 = vmatpush1.msra.mxu0 %v27
    %80 = vmatprep.subr.mxu0 0.0
    %81 = vmatpush1.msra.mxu0 %v28
    %82 = vmatprep.subr.mxu0 0.0
    %83 = vmatpush1.msra.mxu0 %v29
    %84 = vmatprep.subr.mxu0 0.0
    %85 = vmatpush1.msra.mxu0 %v30
    %86 = vmatprep.subr.mxu0 0.0
    %87 = vmatpush1.msra.mxu0 %v31
    %88 = vmatprep.subr.mxu0 0.0
    %89 = vmatpush1.msra.mxu0 %v32
    %90 = vmatprep.subr.mxu0 0.0
    %91 = vmatpush1.msra.mxu0 %v33
    %92 = vmatprep.subr.mxu0 0.0
    %93 = vmatpush1.msra.mxu0 %v34
    %94 = vmatprep.subr.mxu0 0.0
    %95 = vmatpush1.msra.mxu0 %v35
    %96 = vmatprep.subr.mxu0 0.0
    %97 = vmatpush1.msra.mxu0 %v36
    %98 = vmatprep.subr.mxu0 0.0
    %99 = vmatpush1.msra.mxu0 %v37
    %100 = vmatprep.subr.mxu0 0.0
    %101 = vmatpush1.msra.mxu0 %v38
    %102 = vmatprep.subr.mxu0 0.0
    %103 = vmatpush1.msra.mxu0 %v39
    %104 = vmatprep.subr.mxu0 0.0
    %105 = vmatpush1.msra.mxu0 %v40
    %106 = vmatprep.subr.mxu0 0.0
    %107 = vmatpush1.msra.mxu0 %v41
    %108 = vmatprep.subr.mxu0 0.0
    %109 = vmatpush1.msra.mxu0 %v42
    %110 = vmatprep.subr.mxu0 0.0
    %111 = vmatpush1.msra.mxu0 %v43
    %112 = vmatprep.subr.mxu0 0.0
    %113 = vmatpush1.msra.mxu0 %v44
    %114 = vmatprep.subr.mxu0 0.0
    %115 = vmatpush1.msra.mxu0 %v45
    %116 = vmatprep.subr.mxu0 0.0
    %117 = vmatpush1.msra.mxu0 %v46
    %118 = vmatprep.subr.mxu0 0.0
    %119 = vmatpush1.msra.mxu0 %v68
    %120 = vmatprep.subr.mxu0 0.0
    %121 = vmatpush1.msra.mxu0 0.0
    %122 = vmatprep.subr.mxu0 0.0
    %123 = vmatpush1.msra.mxu0 0.0
    %124 = vmatprep.subr.mxu0 0.0
    %125 = vmatpush1.msra.mxu0 0.0
    %126 = vmatprep.subr.mxu0 0.0
    %127 = vmatpush1.msra.mxu0 0.0
    %128 = vmatprep.subr.mxu0 0.0
    %129 = vmatpush1.msra.mxu0 0.0
    %130 = vmatprep.subr.mxu0 0.0
    %131 = vmatpush1.msra.mxu0 0.0
    %132 = vmatprep.subr.mxu0 0.0
    %133 = vmatpush1.msra.mxu0 0.0
    %134 = vmatprep.mubr.f32.mxu0 %v55
    %135 = vmatmul.mubr.f32.gmra.mrb[0].mxu0 %v15
    %v136 = vpop.f32.mrb[0].mxu0
    %v137 = vadd.f32 %v52, %v136
    %v138 = vpop.f32.mrb[0].mxu0
    %139 = vmatprep.mubr.f32.mxu0 %v58
    %140 = vmatmul.mubr.f32.gmra.mrb[0].mxu0 %v17
    %v141 = vpop.f32.mrb[0].mxu0
    %v142 = vadd.f32 %v52, %v141
    %v143 = vpop.f32.mrb[0].mxu0
    %144 = vmatprep.mubr.f32.mxu0 %v61
    %145 = vmatmul.mubr.f32.gmra.mrb[0].mxu0 %v19
    %v146 = vpop.f32.mrb[0].mxu0
    %v147 = vadd.f32 %v52, %v146
    %v148 = vpop.f32.mrb[0].mxu0
    %149 = vmatprep.mubr.f32.mxu0 %v64
    %150 = vmatmul.mubr.f32.gmra.mrb[0].mxu0 %v21
    %v151 = vpop.f32.mrb[0].mxu0
    %v152 = vadd.f32 %v52, %v151
    %v153 = vpop.f32.mrb[0].mxu0
    %154 = vdwg.mxu0
    %155 = vadd.xlane.f32.xlu0 %v137
    %v156 = vpop.xlane.xlu0 %155
    %157 = vadd.xlane.f32.xlu0 %v142
    %v158 = vpop.xlane.xlu0 %157
    %159 = vadd.xlane.f32.xlu0 %v147
    %v160 = vpop.xlane.xlu0 %159
    %161 = vadd.xlane.f32.xlu0 %v152
    %v162 = vpop.xlane.xlu0 %161
    %v163 = vmul.f32 %v156, 0.03125
    %v164 = vmul.f32 %v158, 0.03125
    %v165 = vmul.f32 %v160, 0.03125
    %v166 = vmul.f32 %v162, 0.03125
    %v167 = vsub.f32 %v137, %v163
    %v168 = vsub.f32 %v142, %v164
    %v169 = vsub.f32 %v147, %v165
    %v170 = vsub.f32 %v152, %v166
    %v171 = vlaneseq
    %v172 = vshrl.u32 %v171, 7
    %v173 = vsub.s32 3, %v172
    %v174 = vrot.slane %v48, %v173
    %v175 = vmul.f32 %v167, %v174
    %v176 = vmul.f32 %v168, %v174
    %v177 = vmul.f32 %v169, %v174
    %v178 = vmul.f32 %v170, %v174
    %v179 = vmul.f32 %v175, %v175
    %v180 = vmul.f32 %v176, %v176
    %v181 = vmul.f32 %v177, %v177
    %v182 = vmul.f32 %v178, %v178
    %183 = vadd.xlane.f32.xlu0 %v179
    %v184 = vpop.xlane.xlu0 %183
    %185 = vadd.xlane.f32.xlu0 %v180
    %v186 = vpop.xlane.xlu0 %185
    %187 = vadd.xlane.f32.xlu0 %v181
    %v188 = vpop.xlane.xlu0 %187
    %189 = vadd.xlane.f32.xlu0 %v182
    %v190 = vpop.xlane.xlu0 %189
    %v191 = vmul.f32 %v184, 0.03125
    %v192 = vmul.f32 %v186, 0.03125
    %v193 = vmul.f32 %v188, 0.03125
    %v194 = vmul.f32 %v190, 0.03125
    %v195 = vadd.f32 %v191, 1e-05
    %v196 = vadd.f32 %v192, 1e-05
    %v197 = vadd.f32 %v193, 1e-05
    %v198 = vadd.f32 %v194, 1e-05
    %v199 = vrsqrt.pop %v195
    %v200 = vrsqrt.pop %v196
    %v201 = vrsqrt.pop %v197
    %v202 = vrsqrt.pop %v198
    %v203 = vmul.f32 %v175, %v199
    %v204 = vmul.f32 %v176, %v200
    %v205 = vmul.f32 %v177, %v201
    %v206 = vmul.f32 %v178, %v202
    %v207 = vlaneseq
    %v208 = vshrl.u32 %v207, 7
    %v209 = vsub.s32 1, %v208
    %v210 = vrot.slane %v48, %v209
    %v211 = vmul.f32 %v203, %v210
    %v212 = vmul.f32 %v204, %v210
    %v213 = vmul.f32 %v205, %v210
    %v214 = vmul.f32 %v206, %v210
    %v215 = vlaneseq
    %v216 = vshrl.u32 %v215, 7
    %v217 = vsub.s32 2, %v216
    %v218 = vrot.slane %v48, %v217
    %v219 = vadd.f32 %v211, %v218
    %v220 = vadd.f32 %v212, %v218
    %v221 = vadd.f32 %v213, %v218
    %v222 = vadd.f32 %v214, %v218
    %223 = vst [vmem:[#allocation2] sm:$0xff] %v219
    %224 = vst [vmem:[#allocation2 + $0x8] sm:$0xff] %v220
    %225 = vst [vmem:[#allocation2 + $0x10] sm:$0xff] %v221
    %226 = vst [vmem:[#allocation2 + $0x18] sm:$0xff] %v222
    // Predicated region
    $region14: #{overlap_patch_embed.1} parent=1 // pred_check
      _
    $region15: #{overlap_patch_embed.1} parent=1 // pred_check_branch
      %228 = sbr.rel (0) target = $region17
    $region16: #{overlap_patch_embed.1} parent=1 // pred_region
      %s230 = ssub.s32 512, 512
      %231 = vsyncadd [#allocation3], %s230
      %s232 = sshll.u32 [#allocation2], 4
      %s233 = int_to_ptr.vmem [resolvable:$true] %s232
      %238 = dma.vmem_to_hbm [thread:$0]  %s233, 512, %s3, [#allocation3], 128, 128, 8
    $region17: #{overlap_patch_embed.1} parent=1 // pred_fallthru
      _
    // Predicated region
    $region18: #{overlap_patch_embed.1} parent=1 // pred_check
      _
    $region19: #{overlap_patch_embed.1} parent=1 // pred_check_branch
      %240 = sbr.rel (0) target = $region21
    $region20: #{overlap_patch_embed.1} parent=1 // pred_region
      %241 = dma.done [#allocation3], 512
    $region21: #{overlap_patch_embed.1} parent=1 // pred_fallthru
      _
    %242 = vsyncpa [#allocation3], 1

</llo_original>
